<compile_context>
chip_gen: v7x
topology: tpu7x:2x2x1
jax: 0.10.0
libtpu: 0.0.40
codegen_flags: <defaults>
</compile_context>

<pallas_src>
import functools

import jax
import jax.numpy as jnp
from jax.experimental import pallas as pl
from jax.experimental.pallas import tpu as pltpu


# ------------------------------ fused rotary kernel ----------------------------
def _rope_kernel(cos_ref, sin_ref, q_ref, k_ref, qo_ref, ko_ref, *, half_dim):
    """q/k blocks are (TS, NH, D); cos/sin blocks are (TS, D/2) in f32.

    out[..., :D/2] = x1 * cos - x2 * sin
    out[..., D/2:] = x2 * cos + x1 * sin
    which equals x * cos_full + rotate_half(x) * sin_full (cos_full/sin_full are
    the duplicated [freqs, freqs] tables of the PyTorch module).
    """
    cos = cos_ref[...][:, None, :]            # (TS, 1, D/2), broadcast over heads
    sin = sin_ref[...][:, None, :]

    def _apply(x_ref, o_ref):
        x = x_ref[...].astype(jnp.float32)    # upcast in vregs only
        x1 = x[..., :half_dim]
        x2 = x[..., half_dim:]
        out = jnp.concatenate(
            [x1 * cos - x2 * sin,
             x2 * cos + x1 * sin],
            axis=-1)
        o_ref[...] = out.astype(o_ref.dtype)  # store in the input dtype

    _apply(q_ref, qo_ref)
    _apply(k_ref, ko_ref)


# --------------------------------- module port ---------------------------------
class RotaryEmbedding:
    """JAX/Pallas port of the PyTorch RotaryEmbedding module (forward(q, k))."""

    def __init__(self, dim, max_seq_len=1024):
        assert dim % 2 == 0, "rotary dim must be even"
        self.dim = dim
        self.max_seq_len = max_seq_len
        inv_freq = 1.0 / (10000.0 ** (jnp.arange(0, dim, 2, dtype=jnp.float32) / dim))
        t = jnp.arange(max_seq_len, dtype=jnp.float32)[:, None]
        freqs = t @ inv_freq[None, :]                              # (L, dim/2)
        emb = jnp.concatenate([freqs, freqs], axis=-1)             # (L, dim)
        # register_buffer equivalents (kept to mirror the PyTorch module exactly).
        self.cos_cached = jnp.cos(emb)
        self.sin_cached = jnp.sin(emb)
        # Half-width tables actually fed to the kernel (the full tables are just
        # these concatenated with themselves). Built ONCE here, not per call.
        self._cos_half = jnp.cos(freqs)                            # (L, dim/2) f32
        self._sin_half = jnp.sin(freqs)                            # (L, dim/2) f32

    @staticmethod
    def _pick_seq_tile(S, row_bytes):
        """Largest sequence tile whose double-buffered in+out footprint stays
        well under the smallest default scoped-VMEM limit (16 MiB on v5e)."""
        ts = S if S <= 512 else 512

        def budget(t):
            # inputs + outputs, double-buffered, + slack for internal scratch
            return 2 * 2 * t * row_bytes + (4 << 20)

        while ts > 8 and budget(ts) > (12 << 20):
            ts = max(8, (ts // 2) // 8 * 8)   # keep a multiple of 8 once ts < S
        return ts

    def __call__(self, q, k):
        # q: (B, S, NH, D), k: (B, S, NKV, D), D == self.dim
        B, S, NH, D = q.shape
        NKV = k.shape[2]
        assert D == self.dim and k.shape[0] == B and k.shape[1] == S and k.shape[3] == D
        assert S <= self.max_seq_len, "sequence length exceeds cached rotary tables"
        d2 = D // 2

        cos = self._cos_half[:S]                                   # (S, D/2) f32
        sin = self._sin_half[:S]                                   # (S, D/2) f32

        itemsize = jnp.dtype(q.dtype).itemsize
        row_bytes = (NH + NKV) * D * itemsize + 2 * d2 * 4         # q+k row + table row
        TS = self._pick_seq_tile(S, row_bytes)
        n_s = pl.cdiv(S, TS)

        kernel = functools.partial(_rope_kernel, half_dim=d2)

        tab_spec = pl.BlockSpec((TS, d2), lambda b, s: (s, 0))

        def qk_spec(n_heads):
            return pl.BlockSpec((None, TS, n_heads, D), lambda b, s: (b, s, 0, 0))

        # Explicit scoped-VMEM request derived from the chosen tile (review item),
        # comfortably below every generation's physical VMEM.
        vmem_bytes = int(min(max(2 * 2 * TS * row_bytes + (4 << 20), 16 << 20), 48 << 20))

        qo, ko = pl.pallas_call(
            kernel,
            out_shape=(jax.ShapeDtypeStruct(q.shape, q.dtype),
                       jax.ShapeDtypeStruct(k.shape, k.dtype)),
            grid=(B, n_s),
            in_specs=[tab_spec, tab_spec, qk_spec(NH), qk_spec(NKV)],
            out_specs=(qk_spec(NH), qk_spec(NKV)),
            compiler_params=pltpu.CompilerParams(
                dimension_semantics=("parallel", "parallel"),
                vmem_limit_bytes=vmem_bytes),
        )(cos, sin, q, k)

        return qo, ko


# ------------------------------------ test -------------------------------------
if __name__ == "__main__":
    key = jax.random.PRNGKey(0)
    kq, kk = jax.random.split(key)
    B, S, NH, NKV, D = 2, 8, 4, 2, 8          # matches the MoE model (hidden=32)
    q = jax.random.normal(kq, (B, S, NH, D), dtype=jnp.float32)
    k = jax.random.normal(kk, (B, S, NKV, D), dtype=jnp.float32)

    rope = RotaryEmbedding(dim=D, max_seq_len=1024)
    q_emb, k_emb = rope(q, k)
    jax.block_until_ready((q_emb, k_emb))

    # Pure-jnp reference mirroring the PyTorch rotate_half / apply_rotate_pos_emb.
    def _rot_half(x):
        d2 = x.shape[-1] // 2
        return jnp.concatenate([-x[..., d2:], x[..., :d2]], axis=-1)

    cos = rope.cos_cached[:S][None, :, None, :]        # (1, S, 1, D)
    sin = rope.sin_cached[:S][None, :, None, :]
    q_exp = q * cos + _rot_half(q) * sin
    k_exp = k * cos + _rot_half(k) * sin

    assert q_emb.shape == (B, S, NH, D) and q_emb.dtype == q.dtype
    assert k_emb.shape == (B, S, NKV, D) and k_emb.dtype == k.dtype
    assert jnp.allclose(q_emb, q_exp, atol=1e-5, rtol=1e-5)
    assert jnp.allclose(k_emb, k_exp, atol=1e-5, rtol=1e-5)
    print("KERNEL_OK")
</pallas_src>

<mosaic_0001>
module attributes {stable_mosaic.version = 11 : i64} {
  func.func @_rope_kernel(%arg0: i32, %arg1: i32, %arg2: memref<8x4xf32, #tpu.memory_space<vmem>>, %arg3: memref<8x4xf32, #tpu.memory_space<vmem>>, %arg4: memref<1x8x4x8xf32, #tpu.memory_space<vmem>>, %arg5: memref<1x8x2x8xf32, #tpu.memory_space<vmem>>, %arg6: memref<1x8x4x8xf32, #tpu.memory_space<vmem>>, %arg7: memref<1x8x2x8xf32, #tpu.memory_space<vmem>>) attributes {dimension_semantics = [#tpu.dimension_semantics<parallel>, #tpu.dimension_semantics<parallel>], iteration_bounds = array<i64: 2, 1>, scalar_prefetch = 0 : i64, scratch_operands = 0 : i64, tpu.core_type = #tpu.core_type<tc>, window_params = [{transform_indices = @transform_0, window_bounds = array<i64: 8, 4>}, {transform_indices = @transform_1, window_bounds = array<i64: 8, 4>}, {transform_indices = @transform_2, window_bounds = array<i64: 1, 8, 4, 8>}, {transform_indices = @transform_3, window_bounds = array<i64: 1, 8, 2, 8>}, {transform_indices = @transform_4, window_bounds = array<i64: 1, 8, 4, 8>}, {transform_indices = @transform_5, window_bounds = array<i64: 1, 8, 2, 8>}]} {
    %c0 = arith.constant 0 : index
    %c0_0 = arith.constant 0 : index
    %0 = vector.load %arg2[%c0, %c0_0] : memref<8x4xf32, #tpu.memory_space<vmem>>, vector<8x4xf32>
    %1 = vector.shape_cast %0 : vector<8x4xf32> to vector<8x1x4xf32>
    %c0_1 = arith.constant 0 : index
    %c0_2 = arith.constant 0 : index
    %2 = vector.load %arg3[%c0_1, %c0_2] : memref<8x4xf32, #tpu.memory_space<vmem>>, vector<8x4xf32>
    %3 = vector.shape_cast %2 : vector<8x4xf32> to vector<8x1x4xf32>
    %c0_3 = arith.constant 0 : index
    %c0_4 = arith.constant 0 : index
    %c0_5 = arith.constant 0 : index
    %c0_6 = arith.constant 0 : index
    %4 = vector.load %arg4[%c0_3, %c0_4, %c0_5, %c0_6] : memref<1x8x4x8xf32, #tpu.memory_space<vmem>>, vector<1x8x4x8xf32>
    %5 = vector.shape_cast %4 : vector<1x8x4x8xf32> to vector<8x4x8xf32>
    %6 = vector.extract_strided_slice %5 {offsets = [0, 0, 0], sizes = [8, 4, 4], strides = [1, 1, 1]} : vector<8x4x8xf32> to vector<8x4x4xf32>
    %7 = vector.extract_strided_slice %5 {offsets = [0, 0, 4], sizes = [8, 4, 4], strides = [1, 1, 1]} : vector<8x4x8xf32> to vector<8x4x4xf32>
    %8 = vector.broadcast %1 : vector<8x1x4xf32> to vector<8x4x4xf32>
    %9 = arith.mulf %6, %8 : vector<8x4x4xf32>
    %10 = vector.broadcast %3 : vector<8x1x4xf32> to vector<8x4x4xf32>
    %11 = arith.mulf %7, %10 : vector<8x4x4xf32>
    %12 = arith.subf %9, %11 : vector<8x4x4xf32>
    %13 = vector.broadcast %1 : vector<8x1x4xf32> to vector<8x4x4xf32>
    %14 = arith.mulf %7, %13 : vector<8x4x4xf32>
    %15 = vector.broadcast %3 : vector<8x1x4xf32> to vector<8x4x4xf32>
    %16 = arith.mulf %6, %15 : vector<8x4x4xf32>
    %17 = arith.addf %14, %16 : vector<8x4x4xf32>
    %18 = tpu.concatenate %12, %17 in 2 : vector<8x4x4xf32>, vector<8x4x4xf32> -> vector<8x4x8xf32>
    %c0_7 = arith.constant 0 : index
    %c0_8 = arith.constant 0 : index
    %c0_9 = arith.constant 0 : index
    %c0_10 = arith.constant 0 : index
    %19 = vector.load %arg6[%c0_7, %c0_8, %c0_9, %c0_10] : memref<1x8x4x8xf32, #tpu.memory_space<vmem>>, vector<1x8x4x8xf32>
    %20 = vector.shape_cast %19 : vector<1x8x4x8xf32> to vector<8x4x8xf32>
    %21 = vector.shape_cast %18 : vector<8x4x8xf32> to vector<1x8x4x8xf32>
    tpu.vector_store %arg6[%c0_7, %c0_8, %c0_9, %c0_10], %21 {strides = array<i32>} : memref<1x8x4x8xf32, #tpu.memory_space<vmem>>, vector<1x8x4x8xf32>,
    %c0_11 = arith.constant 0 : index
    %c0_12 = arith.constant 0 : index
    %c0_13 = arith.constant 0 : index
    %c0_14 = arith.constant 0 : index
    %22 = vector.load %arg5[%c0_11, %c0_12, %c0_13, %c0_14] : memref<1x8x2x8xf32, #tpu.memory_space<vmem>>, vector<1x8x2x8xf32>
    %23 = vector.shape_cast %22 : vector<1x8x2x8xf32> to vector<8x2x8xf32>
    %24 = vector.extract_strided_slice %23 {offsets = [0, 0, 0], sizes = [8, 2, 4], strides = [1, 1, 1]} : vector<8x2x8xf32> to vector<8x2x4xf32>
    %25 = vector.extract_strided_slice %23 {offsets = [0, 0, 4], sizes = [8, 2, 4], strides = [1, 1, 1]} : vector<8x2x8xf32> to vector<8x2x4xf32>
    %26 = vector.broadcast %1 : vector<8x1x4xf32> to vector<8x2x4xf32>
    %27 = arith.mulf %24, %26 : vector<8x2x4xf32>
    %28 = vector.broadcast %3 : vector<8x1x4xf32> to vector<8x2x4xf32>
    %29 = arith.mulf %25, %28 : vector<8x2x4xf32>
    %30 = arith.subf %27, %29 : vector<8x2x4xf32>
    %31 = vector.broadcast %1 : vector<8x1x4xf32> to vector<8x2x4xf32>
    %32 = arith.mulf %25, %31 : vector<8x2x4xf32>
    %33 = vector.broadcast %3 : vector<8x1x4xf32> to vector<8x2x4xf32>
    %34 = arith.mulf %24, %33 : vector<8x2x4xf32>
    %35 = arith.addf %32, %34 : vector<8x2x4xf32>
    %36 = tpu.concatenate %30, %35 in 2 : vector<8x2x4xf32>, vector<8x2x4xf32> -> vector<8x2x8xf32>
    %c0_15 = arith.constant 0 : index
    %c0_16 = arith.constant 0 : index
    %c0_17 = arith.constant 0 : index
    %c0_18 = arith.constant 0 : index
    %37 = vector.load %arg7[%c0_15, %c0_16, %c0_17, %c0_18] : memref<1x8x2x8xf32, #tpu.memory_space<vmem>>, vector<1x8x2x8xf32>
    %38 = vector.shape_cast %37 : vector<1x8x2x8xf32> to vector<8x2x8xf32>
    %39 = vector.shape_cast %36 : vector<8x2x8xf32> to vector<1x8x2x8xf32>
    tpu.vector_store %arg7[%c0_15, %c0_16, %c0_17, %c0_18], %39 {strides = array<i32>} : memref<1x8x2x8xf32, #tpu.memory_space<vmem>>, vector<1x8x2x8xf32>,
    return
  }
  func.func @transform_0(%arg0: i32, %arg1: i32) -> (i32, i32) {
    %c0_i32 = arith.constant 0 : i32
    %c0_i32_0 = arith.constant 0 : i32
    return %arg1, %c0_i32 : i32, i32
  }
  func.func @transform_1(%arg0: i32, %arg1: i32) -> (i32, i32) {
    %c0_i32 = arith.constant 0 : i32
    %c0_i32_0 = arith.constant 0 : i32
    return %arg1, %c0_i32 : i32, i32
  }
  func.func @transform_2(%arg0: i32, %arg1: i32) -> (i32, i32, i32, i32) {
    %c0_i32 = arith.constant 0 : i32
    %c0_i32_0 = arith.constant 0 : i32
    %c0_i32_1 = arith.constant 0 : i32
    return %arg0, %arg1, %c0_i32, %c0_i32_0 : i32, i32, i32, i32
  }
  func.func @transform_3(%arg0: i32, %arg1: i32) -> (i32, i32, i32, i32) {
    %c0_i32 = arith.constant 0 : i32
    %c0_i32_0 = arith.constant 0 : i32
    %c0_i32_1 = arith.constant 0 : i32
    return %arg0, %arg1, %c0_i32, %c0_i32_0 : i32, i32, i32, i32
  }
  func.func @transform_4(%arg0: i32, %arg1: i32) -> (i32, i32, i32, i32) {
    %c0_i32 = arith.constant 0 : i32
    %c0_i32_0 = arith.constant 0 : i32
    %c0_i32_1 = arith.constant 0 : i32
    return %arg0, %arg1, %c0_i32, %c0_i32_0 : i32, i32, i32, i32
  }
  func.func @transform_5(%arg0: i32, %arg1: i32) -> (i32, i32, i32, i32) {
    %c0_i32 = arith.constant 0 : i32
    %c0_i32_0 = arith.constant 0 : i32
    %c0_i32_1 = arith.constant 0 : i32
    return %arg0, %arg1, %c0_i32, %c0_i32_0 : i32, i32, i32, i32
  }
}

</mosaic_0001>

<llo_original>
// kernel: tpu_custom_call.1
$region0: #{tpu_custom_call.1}
  #allocation0 [shape = 'u32[]', space=smem, size = 0x4, offset = 0x4, fixed_abs, tag = 'smem constant byte address 0x4 - core index']
  #allocation1 [shape = 'u32[144,128]{1,0:T(1,128)}', space=vmem, size = 0x12000, scoped, tag = 'internal scratch']
  %s0 = inlined_call_operand.vmem [shape: f32[8,4], index: 0, kind: input, shape index: {}]
  %s1 = inlined_call_operand.vmem [shape: f32[8,4], index: 1, kind: input, shape index: {}]
  %s2 = inlined_call_operand.hbm [shape: f32[2,8,4,8], index: 2, kind: input, shape index: {}]
  %s3 = inlined_call_operand.vmem [shape: f32[2,8,2,8], index: 3, kind: input, shape index: {}]
  %s4 = inlined_call_operand.hbm [shape: f32[2,8,4,8], index: 4, kind: output, shape index: {0}]
  %s5 = inlined_call_operand.hbm [shape: f32[2,8,2,8], index: 5, kind: output, shape index: {1}]
  %6 = xla_tuple %s4, %s5
  %s7 = sld [smem:[#allocation0]]
  $region61: #{tpu_custom_call.1} parent=0
    _
  %s9 = ssub.s32 1, %s7
  %s10 = scalar_select 0, %s9, %s7
  $region1: #{tpu_custom_call.1} parent=0
    #allocation2 [shape = 'u8[32768]{0}', space=vmem, size = 0x8000, scoped, tag = 'input window, operand 2']
    #allocation3 [shape = 's32[2]{0}', space=sflag, size = 0x8, scoped, tag = 'scoped memory for tpu_custom_call.1']
    #allocation4 [shape = 's32[2]{0}', space=sflag, size = 0x8, scoped, tag = 'scoped memory for tpu_custom_call.1']
    #allocation5 [shape = 'u8[32768]{0}', space=vmem, size = 0x8000, scoped, tag = 'output window, operand 0']
    #allocation6 [shape = 'u8[16384]{0}', space=vmem, size = 0x4000, scoped, tag = 'output window, operand 1']
    #allocation7 [shape = 's32[2]{0}', space=sflag, size = 0x8, scoped, tag = 'scoped memory for tpu_custom_call.1']
    %11 = vsyncpa [#allocation3], 0
    %s12 = scalar_lea.sflag [#allocation3], 1
    %13 = vsyncpa %s12, 0
    %14 = vsyncpa [#allocation4], 0
    %s15 = scalar_lea.sflag [#allocation4], 1
    %16 = vsyncpa %s15, 0
    %17 = vsyncpa [#allocation7], 0
    %s18 = scalar_lea.sflag [#allocation7], 1
    %19 = vsyncpa %s18, 0
    loop: start=0, step=1, limit=4
    $region2: #{tpu_custom_call.1} parent=1 // loop_pre_header
      _
    $region3: #{tpu_custom_call.1} parent=1 // loop_header
      %s21 = sphi 0, %s25
      %p22 = scmp.ge.s32.totalorder %s21, 4
      %s28 = sphi 0, %s40
      %s29 = sphi 0, %s36
      %s30 = sphi 0, %s28
      %s31 = sphi 0, %s29
      %s32 = sphi 0, %s30
      %s33 = sphi 0, %s31
      %s43 = sphi 0, %s45
      %s46 = sphi 0, %s43
      %s47 = sphi 0, %s46
      %s63 = sphi 0, %s47
      %s69 = sphi 0, %s71
      %s72 = sphi 0, %s69
      %s73 = sphi 0, %s72
      %s89 = sphi 0, %s73
      %s97 = sphi 0, %s99
      %s100 = sphi 0, %s97
      %s101 = sphi 0, %s100
      %s117 = sphi 0, %s101
      %s125 = sphi 0, %s127
      %s128 = sphi 0, %s125
      %s129 = sphi 0, %s128
      %s145 = sphi 0, %s129
      %s153 = sphi 0, %s155
      %s156 = sphi 0, %s153
      %s157 = sphi 0, %s156
      %s173 = sphi 0, %s157
      %s181 = sphi 0, %s183
      %s184 = sphi 0, %s181
      %s185 = sphi 0, %s184
      %s201 = sphi 0, %s185
    $region4: #{tpu_custom_call.1} parent=1 // loop_header_branch
      %24 = sbr.rel (%p22) target = $region8
    $region5: #{tpu_custom_call.1} parent=1 // loop_body
      %s26 = ssub.s32 %s21, 1
      %s27 = ssub.s32 %s21, 2
      %s34 = sadd.s32 1, %s29
      %p35 = scmp.ge.s32.totalorder %s34, 1
      %s36 = scalar_select %p35, 0, %s34
      %s37 = sadd.s32 1, %s28
      %s38 = scalar_select %p35, %s37, %s28
      %p39 = scmp.ge.s32.totalorder %s38, 2
      %s40 = scalar_select %p39, 0, %s38
      %s41 = ssub.s32 %s29, %s36
      %p42 = scmp.eq.s32.totalorder %s41, 0
      %s44 = sadd.s32 %s43, 1
      %s45 = scalar_select %p42, %s43, %s44
      %p48 = pneg %p42
      %p49 = scmp.eq.s32.totalorder %s21, 1
      %p50 = por %p48, %p49
      %p51 = scmp.ne.s32.totalorder %s43, %s46
      %p52 = scmp.eq.s32.totalorder %s21, 0
      %p53 = por %p51, %p52
      %p54 = scmp.ne.s32.totalorder %s43, %s46
      %p55 = scmp.eq.s32.totalorder %s26, 1
      %p56 = por %p54, %p55
      %p57 = scmp.ne.s32.totalorder %s46, %s47
      %p58 = scmp.eq.s32.totalorder %s26, 0
      %p59 = por %p57, %p58
      %p60 = scmp.ne.s32.totalorder %s46, %s47
      %p61 = scmp.eq.s32.totalorder %s27, 1
      %p62 = por %p60, %p61
      %p64 = scmp.ne.s32.totalorder %s47, %s63
      %p65 = scmp.eq.s32.totalorder %s27, 0
      %p66 = por %p64, %p65
      %s67 = ssub.s32 %s29, %s36
      %p68 = scmp.eq.s32.totalorder %s67, 0
      %s70 = sadd.s32 %s69, 1
      %s71 = scalar_select %p68, %s69, %s70
      %p74 = pneg %p68
      %p75 = scmp.eq.s32.totalorder %s21, 1
      %p76 = por %p74, %p75
      %p77 = scmp.ne.s32.totalorder %s69, %s72
      %p78 = scmp.eq.s32.totalorder %s21, 0
      %p79 = por %p77, %p78
      %p80 = scmp.ne.s32.totalorder %s69, %s72
      %p81 = scmp.eq.s32.totalorder %s26, 1
      %p82 = por %p80, %p81
      %p83 = scmp.ne.s32.totalorder %s72, %s73
      %p84 = scmp.eq.s32.totalorder %s26, 0
      %p85 = por %p83, %p84
      %p86 = scmp.ne.s32.totalorder %s72, %s73
      %p87 = scmp.eq.s32.totalorder %s27, 1
      %p88 = por %p86, %p87
      %p90 = scmp.ne.s32.totalorder %s73, %s89
      %p91 = scmp.eq.s32.totalorder %s27, 0
      %p92 = por %p90, %p91
      %s93 = ssub.s32 %s28, %s40
      %s94 = ssub.s32 %s29, %s36
      %s95 = sor.u32 %s93, %s94
      %p96 = scmp.eq.s32.totalorder %s95, 0
      %s98 = sadd.s32 %s97, 1
      %s99 = scalar_select %p96, %s97, %s98
      %p102 = pneg %p96
      %p103 = scmp.eq.s32.totalorder %s21, 1
      %p104 = por %p102, %p103
      %p105 = scmp.ne.s32.totalorder %s97, %s100
      %p106 = scmp.eq.s32.totalorder %s21, 0
      %p107 = por %p105, %p106
      %p108 = scmp.ne.s32.totalorder %s97, %s100
      %p109 = scmp.eq.s32.totalorder %s26, 1
      %p110 = por %p108, %p109
      %p111 = scmp.ne.s32.totalorder %s100, %s101
      %p112 = scmp.eq.s32.totalorder %s26, 0
      %p113 = por %p111, %p112
      %p114 = scmp.ne.s32.totalorder %s100, %s101
      %p115 = scmp.eq.s32.totalorder %s27, 1
      %p116 = por %p114, %p115
      %p118 = scmp.ne.s32.totalorder %s101, %s117
      %p119 = scmp.eq.s32.totalorder %s27, 0
      %p120 = por %p118, %p119
      %s121 = ssub.s32 %s28, %s40
      %s122 = ssub.s32 %s29, %s36
      %s123 = sor.u32 %s121, %s122
      %p124 = scmp.eq.s32.totalorder %s123, 0
      %s126 = sadd.s32 %s125, 1
      %s127 = scalar_select %p124, %s125, %s126
      %p130 = pneg %p124
      %p131 = scmp.eq.s32.totalorder %s21, 1
      %p132 = por %p130, %p131
      %p133 = scmp.ne.s32.totalorder %s125, %s128
      %p134 = scmp.eq.s32.totalorder %s21, 0
      %p135 = por %p133, %p134
      %p136 = scmp.ne.s32.totalorder %s125, %s128
      %p137 = scmp.eq.s32.totalorder %s26, 1
      %p138 = por %p136, %p137
      %p139 = scmp.ne.s32.totalorder %s128, %s129
      %p140 = scmp.eq.s32.totalorder %s26, 0
      %p141 = por %p139, %p140
      %p142 = scmp.ne.s32.totalorder %s128, %s129
      %p143 = scmp.eq.s32.totalorder %s27, 1
      %p144 = por %p142, %p143
      %p146 = scmp.ne.s32.totalorder %s129, %s145
      %p147 = scmp.eq.s32.totalorder %s27, 0
      %p148 = por %p146, %p147
      %s149 = ssub.s32 %s28, %s40
      %s150 = ssub.s32 %s29, %s36
      %s151 = sor.u32 %s149, %s150
      %p152 = scmp.eq.s32.totalorder %s151, 0
      %s154 = sadd.s32 %s153, 1
      %s155 = scalar_select %p152, %s153, %s154
      %p158 = pneg %p152
      %p159 = scmp.eq.s32.totalorder %s21, 1
      %p160 = por %p158, %p159
      %p161 = scmp.ne.s32.totalorder %s153, %s156
      %p162 = scmp.eq.s32.totalorder %s21, 0
      %p163 = por %p161, %p162
      %p164 = scmp.ne.s32.totalorder %s153, %s156
      %p165 = scmp.eq.s32.totalorder %s26, 1
      %p166 = por %p164, %p165
      %p167 = scmp.ne.s32.totalorder %s156, %s157
      %p168 = scmp.eq.s32.totalorder %s26, 0
      %p169 = por %p167, %p168
      %p170 = scmp.ne.s32.totalorder %s156, %s157
      %p171 = scmp.eq.s32.totalorder %s27, 1
      %p172 = por %p170, %p171
      %p174 = scmp.ne.s32.totalorder %s157, %s173
      %p175 = scmp.eq.s32.totalorder %s27, 0
      %p176 = por %p174, %p175
      %s177 = ssub.s32 %s28, %s40
      %s178 = ssub.s32 %s29, %s36
      %s179 = sor.u32 %s177, %s178
      %p180 = scmp.eq.s32.totalorder %s179, 0
      %s182 = sadd.s32 %s181, 1
      %s183 = scalar_select %p180, %s181, %s182
      %p186 = pneg %p180
      %p187 = scmp.eq.s32.totalorder %s21, 1
      %p188 = por %p186, %p187
      %p189 = scmp.ne.s32.totalorder %s181, %s184
      %p190 = scmp.eq.s32.totalorder %s21, 0
      %p191 = por %p189, %p190
      %p192 = scmp.ne.s32.totalorder %s181, %s184
      %p193 = scmp.eq.s32.totalorder %s26, 1
      %p194 = por %p192, %p193
      %p195 = scmp.ne.s32.totalorder %s184, %s185
      %p196 = scmp.eq.s32.totalorder %s26, 0
      %p197 = por %p195, %p196
      %p198 = scmp.ne.s32.totalorder %s184, %s185
      %p199 = scmp.eq.s32.totalorder %s27, 1
      %p200 = por %p198, %p199
      %p202 = scmp.ne.s32.totalorder %s185, %s201
      %p203 = scmp.eq.s32.totalorder %s27, 0
      %p204 = por %p202, %p203
      %p205 = scmp.le.s32.totalorder 1, %s21
      %p206 = scmp.lt.s32.totalorder %s21, 3
      %p207 = pnand %p205, %p206
      %p208 = pneg %p207
      // Predicated region
      $region9: #{tpu_custom_call.1} parent=5 // pred_check
        _
      $region10: #{tpu_custom_call.1} parent=5 // pred_check_branch
        %210 = sbr.rel (%p207) target = $region12
      $region11: #{tpu_custom_call.1} parent=5 // pred_region
        %s211 = ssub.s32 %s21, 1
        // Predicated region
        $region13: #{tpu_custom_call.1} parent=11 // pred_check
          %p212 = pneg %p59
        $region14: #{tpu_custom_call.1} parent=11 // pred_check_branch
          %214 = sbr.rel (%p212) target = $region16
        $region15: #{tpu_custom_call.1} parent=11 // pred_region
          %p215 = scmp.lt.s32.totalorder %s31, 0
          %s216 = scalar_select %p215, %s31, 0
          %s217 = smul.addr %s216, 8
          %s218 = scalar_lea.vmem %s0, %s217
        $region16: #{tpu_custom_call.1} parent=11 // pred_fallthru
          _
        // Predicated region
        $region17: #{tpu_custom_call.1} parent=11 // pred_check
          %p219 = pneg %p85
        $region18: #{tpu_custom_call.1} parent=11 // pred_check_branch
          %221 = sbr.rel (%p219) target = $region20
        $region19: #{tpu_custom_call.1} parent=11 // pred_region
          %p222 = scmp.lt.s32.totalorder %s31, 0
          %s223 = scalar_select %p222, %s31, 0
          %s224 = smul.addr %s223, 8
          %s225 = scalar_lea.vmem %s1, %s224
        $region20: #{tpu_custom_call.1} parent=11 // pred_fallthru
          _
      $region12: #{tpu_custom_call.1} parent=5 // pred_fallthru
        _
      %p226 = scmp.lt.s32.totalorder %s21, 2
      // Predicated region
      $region21: #{tpu_custom_call.1} parent=5 // pred_check
        %p227 = pneg %p226
      $region22: #{tpu_custom_call.1} parent=5 // pred_check_branch
        %229 = sbr.rel (%p227) target = $region24
      $region23: #{tpu_custom_call.1} parent=5 // pred_region
        // Predicated region
        $region25: #{tpu_custom_call.1} parent=23 // pred_check
          %p230 = pneg %p107
        $region26: #{tpu_custom_call.1} parent=23 // pred_check_branch
          %232 = sbr.rel (%p230) target = $region28
        $region27: #{tpu_custom_call.1} parent=23 // pred_region
          %s233 = sand.u32 %s97, 1
          %s234 = scalar_lea.sflag [#allocation3], %s233
          %s235 = sand.u32 %s97, 1
          %s236 = smul.addr %s235, 32
          %s237 = scalar_lea.vmem [#allocation2], %s236
          %s238 = smul.u32 8, %s29
          %s240 = ssub.s32 512, 512
          %241 = vsyncadd %s234, %s240
          %s242 = smul.addr %s28, 8
          %s243 = sadd.s32 %s238, %s242
          %s244 = smul.addr %s243, 64
          %s245 = scalar_lea.hbm %s2, %s244
          %s246 = sshll.u32 %s237, 4
          %s247 = int_to_ptr.vmem [resolvable:$true] %s246
          %252 = dma.hbm_to_vmem [thread:$0]  %s245, 512, %s247, %s234, 64, 64, 4
        $region28: #{tpu_custom_call.1} parent=23 // pred_fallthru
          _
        // Predicated region
        $region29: #{tpu_custom_call.1} parent=23 // pred_check
          %p253 = pneg %p135
        $region30: #{tpu_custom_call.1} parent=23 // pred_check_branch
          %255 = sbr.rel (%p253) target = $region32
        $region31: #{tpu_custom_call.1} parent=23 // pred_region
          %s256 = smul.u32 8, %s29
          %p257 = scmp.lt.s32.totalorder %s28, 1
          %s258 = scalar_select %p257, %s28, 1
          %p259 = scmp.lt.s32.totalorder %s256, 7
          %s260 = scalar_select %p259, %s256, 7
          %s261 = smul.addr %s258, 8
          %s262 = sadd.s32 %s260, %s261
          %s263 = smul.addr %s262, 2
          %s264 = scalar_lea.vmem %s3, %s263
          %s265 = smul.u32 8, %s29
        $region32: #{tpu_custom_call.1} parent=23 // pred_fallthru
          _
      $region24: #{tpu_custom_call.1} parent=5 // pred_fallthru
        _
      %p266 = scmp.le.s32.totalorder 1, %s21
      %p267 = scmp.lt.s32.totalorder %s21, 3
      %p268 = pnand %p266, %p267
      %p269 = pneg %p268
      // Predicated region
      $region33: #{tpu_custom_call.1} parent=5 // pred_check
        _
      $region34: #{tpu_custom_call.1} parent=5 // pred_check_branch
        %271 = sbr.rel (%p268) target = $region36
      $region35: #{tpu_custom_call.1} parent=5 // pred_region
        %s272 = ssub.s32 %s21, 1
        %s273 = sand.u32 %s100, 1
        %s274 = scalar_lea.sflag [#allocation3], %s273
        %s275 = sand.u32 %s100, 1
        %s276 = smul.addr %s275, 32
        %s277 = scalar_lea.vmem [#allocation2], %s276
        // Predicated region
        $region37: #{tpu_custom_call.1} parent=35 // pred_check
          %p278 = pneg %p113
        $region38: #{tpu_custom_call.1} parent=35 // pred_check_branch
          %280 = sbr.rel (%p278) target = $region40
        $region39: #{tpu_custom_call.1} parent=35 // pred_region
          %281 = dma.done %s274, 512
        $region40: #{tpu_custom_call.1} parent=35 // pred_fallthru
          _
        %p282 = scmp.lt.s32.totalorder %s31, 0
        %s283 = scalar_select %p282, %s31, 0
        %s284 = smul.addr %s283, 8
        %s285 = scalar_lea.vmem %s0, %s284
        %p286 = pneg %p59
        %p287 = pneg %p56
        %p288 = scmp.lt.s32.totalorder %s31, 0
        %s289 = scalar_select %p288, %s31, 0
        %s290 = smul.addr %s289, 8
        %s291 = scalar_lea.vmem %s1, %s290
        %p292 = pneg %p85
        %p293 = pneg %p82
        %s294 = sand.u32 %s100, 1
        %s295 = scalar_lea.sflag [#allocation3], %s294
        %s296 = sand.u32 %s100, 1
        %s297 = smul.addr %s296, 32
        %s298 = scalar_lea.vmem [#allocation2], %s297
        %p299 = pneg %p113
        %p300 = pneg %p110
        %s301 = smul.u32 8, %s31
        %p302 = scmp.lt.s32.totalorder %s30, 1
        %s303 = scalar_select %p302, %s30, 1
        %p304 = scmp.lt.s32.totalorder %s301, 7
        %s305 = scalar_select %p304, %s301, 7
        %s306 = smul.addr %s303, 8
        %s307 = sadd.s32 %s305, %s306
        %s308 = smul.addr %s307, 2
        %s309 = scalar_lea.vmem %s3, %s308
        %p310 = pneg %p141
        %p311 = pneg %p138
        %p312 = pneg %p169
        %p313 = pneg %p166
        %s314 = sand.u32 %s156, 1
        %s315 = scalar_lea.sflag [#allocation4], %s314
        %s316 = sand.u32 %s156, 1
        %s317 = smul.addr %s316, 32
        %s318 = scalar_lea.vmem [#allocation5], %s317
        %p319 = pneg %p197
        %p320 = pneg %p194
        %s321 = sand.u32 %s184, 1
        %s322 = scalar_lea.sflag [#allocation7], %s321
        %s323 = sand.u32 %s184, 1
        %s324 = smul.addr %s323, 16
        %s325 = scalar_lea.vmem [#allocation6], %s324
        %p326 = scmp.lt.s32.totalorder %s31, 0
        %s327 = scalar_select %p326, %s31, 0
        %s328 = smul.addr %s327, 8
        %s329 = scalar_lea.vmem %s0, %s328
        %p330 = scmp.lt.s32.totalorder %s31, 0
        %s331 = scalar_select %p330, %s31, 0
        %s332 = smul.addr %s331, 8
        %s333 = scalar_lea.vmem %s1, %s332
        %s334 = smul.u32 8, %s31
        %s335 = smul.u32 8, %s31
        %p336 = scmp.lt.s32.totalorder %s30, 1
        %s337 = scalar_select %p336, %s30, 1
        %p338 = scmp.lt.s32.totalorder %s335, 7
        %s339 = scalar_select %p338, %s335, 7
        %s340 = smul.addr %s337, 8
        %s341 = sadd.s32 %s339, %s340
        %s342 = smul.addr %s341, 2
        %s343 = scalar_lea.vmem %s3, %s342
        %s344 = smul.u32 8, %s31
        %s345 = smul.u32 8, %s31
        %s346 = smul.u32 8, %s31
        %v347 = vld [vmem:[%s329] sm:$0xff]
        %v349 = vcombine.high %v347, %v347
        %v351 = vunpack.c.l.s4 1966171168
        %v352 = vunpack.c.0.s8 %v351
        %v353 = vlaneseq
        %v354 = vshrl.u32 %v353, 7
        %v355 = vsub.s32 %v352, %v354
        %v356 = vrot.slane %v347, %v355
        %v358 = vunpack.c.l.s4 1966171168
        %v359 = vunpack.c.0.s8 %v358
        %v360 = vlaneseq
        %v361 = vshrl.u32 %v360, 7
        %v362 = vsub.s32 %v359, %v361
        %v363 = vrot.slane %v349, %v362
        %v364 = vcombine.high %v356, %v356
        %v365 = vcombine.high %v363, %v363
        %v367 = vunpack.c.l.s4 1966171168
        %v368 = vunpack.c.0.s8 %v367
        %v369 = vlaneseq
        %v370 = vshrl.u32 %v369, 7
        %v371 = vsub.s32 %v368, %v370
        %v372 = vrot.slane %v356, %v371
        %v374 = vunpack.c.l.s4 1966171168
        %v375 = vunpack.c.0.s8 %v374
        %v376 = vlaneseq
        %v377 = vshrl.u32 %v376, 7
        %v378 = vsub.s32 %v375, %v377
        %v379 = vrot.slane %v363, %v378
        %v381 = vunpack.c.l.s4 1966171168
        %v382 = vunpack.c.0.s8 %v381
        %v383 = vlaneseq
        %v384 = vshrl.u32 %v383, 7
        %v385 = vsub.s32 %v382, %v384
        %v386 = vrot.slane %v364, %v385
        %v388 = vunpack.c.l.s4 1966171168
        %v389 = vunpack.c.0.s8 %v388
        %v390 = vlaneseq
        %v391 = vshrl.u32 %v390, 7
        %v392 = vsub.s32 %v389, %v391
        %v393 = vrot.slane %v365, %v392
        %v394 = vcombine.high %v372, %v372
        %v395 = vcombine.high %v379, %v379
        %v396 = vcombine.high %v386, %v386
        %v397 = vcombine.high %v393, %v393
        %v398 = vld [vmem:[%s333] sm:$0xff]
        %v400 = vcombine.high %v398, %v398
        %v402 = vunpack.c.l.s4 1966171168
        %v403 = vunpack.c.0.s8 %v402
        %v404 = vlaneseq
        %v405 = vshrl.u32 %v404, 7
        %v406 = vsub.s32 %v403, %v405
        %v407 = vrot.slane %v398, %v406
        %v409 = vunpack.c.l.s4 1966171168
        %v410 = vunpack.c.0.s8 %v409
        %v411 = vlaneseq
        %v412 = vshrl.u32 %v411, 7
        %v413 = vsub.s32 %v410, %v412
        %v414 = vrot.slane %v400, %v413
        %v415 = vcombine.high %v407, %v407
        %v416 = vcombine.high %v414, %v414
        %v418 = vunpack.c.l.s4 1966171168
        %v419 = vunpack.c.0.s8 %v418
        %v420 = vlaneseq
        %v421 = vshrl.u32 %v420, 7
        %v422 = vsub.s32 %v419, %v421
        %v423 = vrot.slane %v407, %v422
        %v425 = vunpack.c.l.s4 1966171168
        %v426 = vunpack.c.0.s8 %v425
        %v427 = vlaneseq
        %v428 = vshrl.u32 %v427, 7
        %v429 = vsub.s32 %v426, %v428
        %v430 = vrot.slane %v414, %v429
        %v432 = vunpack.c.l.s4 1966171168
        %v433 = vunpack.c.0.s8 %v432
        %v434 = vlaneseq
        %v435 = vshrl.u32 %v434, 7
        %v436 = vsub.s32 %v433, %v435
        %v437 = vrot.slane %v415, %v436
        %v439 = vunpack.c.l.s4 1966171168
        %v440 = vunpack.c.0.s8 %v439
        %v441 = vlaneseq
        %v442 = vshrl.u32 %v441, 7
        %v443 = vsub.s32 %v440, %v442
        %v444 = vrot.slane %v416, %v443
        %v445 = vcombine.high %v423, %v423
        %v446 = vcombine.high %v430, %v430
        %v447 = vcombine.high %v437, %v437
        %v448 = vcombine.high %v444, %v444
        %v449 = vld [vmem:[%s277] sm:$0xf]
        %v450 = vld [vmem:[%s277 + $0x4] sm:$0xf]
        %v451 = vld [vmem:[%s277 + $0x8] sm:$0xf]
        %v452 = vld [vmem:[%s277 + $0xc] sm:$0xf]
        %v453 = vld [vmem:[%s277 + $0x10] sm:$0xf]
        %v454 = vld [vmem:[%s277 + $0x14] sm:$0xf]
        %v455 = vld [vmem:[%s277 + $0x18] sm:$0xf]
        %v456 = vld [vmem:[%s277 + $0x1c] sm:$0xf]
        %v457 = vlaneseq
        %v458 = vshrl.u32 %v457, 7
        %v459 = vsub.s32 0, %v458
        %v460 = vrot.slane %v372, %v459
        %v461 = vlaneseq
        %v462 = vshrl.u32 %v461, 7
        %v463 = vsub.s32 0, %v462
        %v464 = vrot.slane %v386, %v463
        %v465 = vlaneseq
        %v466 = vshrl.u32 %v465, 7
        %v467 = vsub.s32 0, %v466
        %v468 = vrot.slane %v394, %v467
        %v469 = vlaneseq
        %v470 = vshrl.u32 %v469, 7
        %v471 = vsub.s32 0, %v470
        %v472 = vrot.slane %v396, %v471
        %v473 = vlaneseq
        %v474 = vshrl.u32 %v473, 7
        %v475 = vsub.s32 0, %v474
        %v476 = vrot.slane %v379, %v475
        %v477 = vlaneseq
        %v478 = vshrl.u32 %v477, 7
        %v479 = vsub.s32 0, %v478
        %v480 = vrot.slane %v393, %v479
        %v481 = vlaneseq
        %v482 = vshrl.u32 %v481, 7
        %v483 = vsub.s32 0, %v482
        %v484 = vrot.slane %v395, %v483
        %v485 = vlaneseq
        %v486 = vshrl.u32 %v485, 7
        %v487 = vsub.s32 0, %v486
        %v488 = vrot.slane %v397, %v487
        %v497 = vmul.f32 %v449, %v460
        %v498 = vmul.f32 %v450, %v464
        %v499 = vmul.f32 %v451, %v468
        %v500 = vmul.f32 %v452, %v472
        %v501 = vmul.f32 %v453, %v476
        %v502 = vmul.f32 %v454, %v480
        %v503 = vmul.f32 %v455, %v484
        %v504 = vmul.f32 %v456, %v488
        %v505 = vlaneseq
        %v506 = vshrl.u32 %v505, 7
        %v507 = vsub.s32 0, %v506
        %v508 = vrot.slane %v423, %v507
        %v509 = vlaneseq
        %v510 = vshrl.u32 %v509, 7
        %v511 = vsub.s32 0, %v510
        %v512 = vrot.slane %v437, %v511
        %v513 = vlaneseq
        %v514 = vshrl.u32 %v513, 7
        %v515 = vsub.s32 0, %v514
        %v516 = vrot.slane %v445, %v515
        %v517 = vlaneseq
        %v518 = vshrl.u32 %v517, 7
        %v519 = vsub.s32 0, %v518
        %v520 = vrot.slane %v447, %v519
        %v521 = vlaneseq
        %v522 = vshrl.u32 %v521, 7
        %v523 = vsub.s32 0, %v522
        %v524 = vrot.slane %v430, %v523
        %v525 = vlaneseq
        %v526 = vshrl.u32 %v525, 7
        %v527 = vsub.s32 0, %v526
        %v528 = vrot.slane %v444, %v527
        %v529 = vlaneseq
        %v530 = vshrl.u32 %v529, 7
        %v531 = vsub.s32 0, %v530
        %v532 = vrot.slane %v446, %v531
        %v533 = vlaneseq
        %v534 = vshrl.u32 %v533, 7
        %v535 = vsub.s32 0, %v534
        %v536 = vrot.slane %v448, %v535
        %545 = vrot.lane.b32.xlu0 %v508, 4
        %v546 = vpop.permute.xlu0 %545
        %547 = vrot.lane.b32.xlu0 %v512, 4
        %v548 = vpop.permute.xlu0 %547
        %549 = vrot.lane.b32.xlu0 %v516, 4
        %v550 = vpop.permute.xlu0 %549
        %551 = vrot.lane.b32.xlu0 %v520, 4
        %v552 = vpop.permute.xlu0 %551
        %553 = vrot.lane.b32.xlu0 %v524, 4
        %v554 = vpop.permute.xlu0 %553
        %555 = vrot.lane.b32.xlu0 %v528, 4
        %v556 = vpop.permute.xlu0 %555
        %557 = vrot.lane.b32.xlu0 %v532, 4
        %v558 = vpop.permute.xlu0 %557
        %559 = vrot.lane.b32.xlu0 %v536, 4
        %v560 = vpop.permute.xlu0 %559
        %v569 = vmul.f32 %v449, %v546
        %v570 = vmul.f32 %v450, %v548
        %v571 = vmul.f32 %v451, %v550
        %v572 = vmul.f32 %v452, %v552
        %v573 = vmul.f32 %v453, %v554
        %v574 = vmul.f32 %v454, %v556
        %v575 = vmul.f32 %v455, %v558
        %v576 = vmul.f32 %v456, %v560
        %585 = vrot.lane.b32.xlu0 %v569, 124
        %v586 = vpop.permute.xlu0 %585
        %587 = vrot.lane.b32.xlu0 %v570, 124
        %v588 = vpop.permute.xlu0 %587
        %589 = vrot.lane.b32.xlu0 %v571, 124
        %v590 = vpop.permute.xlu0 %589
        %591 = vrot.lane.b32.xlu0 %v572, 124
        %v592 = vpop.permute.xlu0 %591
        %593 = vrot.lane.b32.xlu0 %v573, 124
        %v594 = vpop.permute.xlu0 %593
        %595 = vrot.lane.b32.xlu0 %v574, 124
        %v596 = vpop.permute.xlu0 %595
        %597 = vrot.lane.b32.xlu0 %v575, 124
        %v598 = vpop.permute.xlu0 %597
        %599 = vrot.lane.b32.xlu0 %v576, 124
        %v600 = vpop.permute.xlu0 %599
        %v609 = vsub.f32 %v497, %v586
        %v610 = vsub.f32 %v498, %v588
        %v611 = vsub.f32 %v499, %v590
        %v612 = vsub.f32 %v500, %v592
        %v613 = vsub.f32 %v501, %v594
        %v614 = vsub.f32 %v502, %v596
        %v615 = vsub.f32 %v503, %v598
        %v616 = vsub.f32 %v504, %v600
        %617 = vrot.lane.b32.xlu0 %v460, 4
        %v618 = vpop.permute.xlu0 %617
        %619 = vrot.lane.b32.xlu0 %v464, 4
        %v620 = vpop.permute.xlu0 %619
        %621 = vrot.lane.b32.xlu0 %v468, 4
        %v622 = vpop.permute.xlu0 %621
        %623 = vrot.lane.b32.xlu0 %v472, 4
        %v624 = vpop.permute.xlu0 %623
        %625 = vrot.lane.b32.xlu0 %v476, 4
        %v626 = vpop.permute.xlu0 %625
        %627 = vrot.lane.b32.xlu0 %v480, 4
        %v628 = vpop.permute.xlu0 %627
        %629 = vrot.lane.b32.xlu0 %v484, 4
        %v630 = vpop.permute.xlu0 %629
        %631 = vrot.lane.b32.xlu0 %v488, 4
        %v632 = vpop.permute.xlu0 %631
        %v641 = vmul.f32 %v449, %v618
        %v642 = vmul.f32 %v450, %v620
        %v643 = vmul.f32 %v451, %v622
        %v644 = vmul.f32 %v452, %v624
        %v645 = vmul.f32 %v453, %v626
        %v646 = vmul.f32 %v454, %v628
        %v647 = vmul.f32 %v455, %v630
        %v648 = vmul.f32 %v456, %v632
        %v649 = vmul.f32 %v449, %v508
        %v650 = vmul.f32 %v450, %v512
        %v651 = vmul.f32 %v451, %v516
        %v652 = vmul.f32 %v452, %v520
        %v653 = vmul.f32 %v453, %v524
        %v654 = vmul.f32 %v454, %v528
        %v655 = vmul.f32 %v455, %v532
        %v656 = vmul.f32 %v456, %v536
        %665 = vrot.lane.b32.xlu0 %v649, 4
        %v666 = vpop.permute.xlu0 %665
        %667 = vrot.lane.b32.xlu0 %v650, 4
        %v668 = vpop.permute.xlu0 %667
        %669 = vrot.lane.b32.xlu0 %v651, 4
        %v670 = vpop.permute.xlu0 %669
        %671 = vrot.lane.b32.xlu0 %v652, 4
        %v672 = vpop.permute.xlu0 %671
        %673 = vrot.lane.b32.xlu0 %v653, 4
        %v674 = vpop.permute.xlu0 %673
        %675 = vrot.lane.b32.xlu0 %v654, 4
        %v676 = vpop.permute.xlu0 %675
        %677 = vrot.lane.b32.xlu0 %v655, 4
        %v678 = vpop.permute.xlu0 %677
        %679 = vrot.lane.b32.xlu0 %v656, 4
        %v680 = vpop.permute.xlu0 %679
        %v689 = vadd.f32 %v641, %v666
        %v690 = vadd.f32 %v642, %v668
        %v691 = vadd.f32 %v643, %v670
        %v692 = vadd.f32 %v644, %v672
        %v693 = vadd.f32 %v645, %v674
        %v694 = vadd.f32 %v646, %v676
        %v695 = vadd.f32 %v647, %v678
        %v696 = vadd.f32 %v648, %v680
        %vm697 = vcmask 31744
        %v698 = vsel %vm697, %v609, %v689
        %v699 = vsel %vm697, %v610, %v690
        %v700 = vsel %vm697, %v611, %v691
        %v701 = vsel %vm697, %v612, %v692
        %v702 = vsel %vm697, %v613, %v693
        %v703 = vsel %vm697, %v614, %v694
        %v704 = vsel %vm697, %v615, %v695
        %v705 = vsel %vm697, %v616, %v696
        %vm706 = vcmask 60416
        %707 = vst.msk [vmem:[%s318] sm:$0xf] %vm706, %v698
        %708 = vst.msk [vmem:[%s318 + $0x4] sm:$0xf] %vm706, %v699
        %709 = vst.msk [vmem:[%s318 + $0x8] sm:$0xf] %vm706, %v700
        %710 = vst.msk [vmem:[%s318 + $0xc] sm:$0xf] %vm706, %v701
        %711 = vst.msk [vmem:[%s318 + $0x10] sm:$0xf] %vm706, %v702
        %712 = vst.msk [vmem:[%s318 + $0x14] sm:$0xf] %vm706, %v703
        %713 = vst.msk [vmem:[%s318 + $0x18] sm:$0xf] %vm706, %v704
        %714 = vst.msk [vmem:[%s318 + $0x1c] sm:$0xf] %vm706, %v705
        %v715 = vld [vmem:[%s343] sm:$0x3]
        %v716 = vld [vmem:[%s343 + $0x2] sm:$0x3]
        %v717 = vld [vmem:[%s343 + $0x4] sm:$0x3]
        %v718 = vld [vmem:[%s343 + $0x6] sm:$0x3]
        %v719 = vld [vmem:[%s343 + $0x8] sm:$0x3]
        %v720 = vld [vmem:[%s343 + $0xa] sm:$0x3]
        %v721 = vld [vmem:[%s343 + $0xc] sm:$0x3]
        %v722 = vld [vmem:[%s343 + $0xe] sm:$0x3]
        %v723 = vmul.f32 %v715, %v460
        %v724 = vmul.f32 %v716, %v464
        %v725 = vmul.f32 %v717, %v468
        %v726 = vmul.f32 %v718, %v472
        %v727 = vmul.f32 %v719, %v476
        %v728 = vmul.f32 %v720, %v480
        %v729 = vmul.f32 %v721, %v484
        %v730 = vmul.f32 %v722, %v488
        %v731 = vmul.f32 %v715, %v546
        %v732 = vmul.f32 %v716, %v548
        %v733 = vmul.f32 %v717, %v550
        %v734 = vmul.f32 %v718, %v552
        %v735 = vmul.f32 %v719, %v554
        %v736 = vmul.f32 %v720, %v556
        %v737 = vmul.f32 %v721, %v558
        %v738 = vmul.f32 %v722, %v560
        %747 = vrot.lane.b32.xlu0 %v731, 124
        %v748 = vpop.permute.xlu0 %747
        %749 = vrot.lane.b32.xlu0 %v732, 124
        %v750 = vpop.permute.xlu0 %749
        %751 = vrot.lane.b32.xlu0 %v733, 124
        %v752 = vpop.permute.xlu0 %751
        %753 = vrot.lane.b32.xlu0 %v734, 124
        %v754 = vpop.permute.xlu0 %753
        %755 = vrot.lane.b32.xlu0 %v735, 124
        %v756 = vpop.permute.xlu0 %755
        %757 = vrot.lane.b32.xlu0 %v736, 124
        %v758 = vpop.permute.xlu0 %757
        %759 = vrot.lane.b32.xlu0 %v737, 124
        %v760 = vpop.permute.xlu0 %759
        %761 = vrot.lane.b32.xlu0 %v738, 124
        %v762 = vpop.permute.xlu0 %761
        %v771 = vsub.f32 %v723, %v748
        %v772 = vsub.f32 %v724, %v750
        %v773 = vsub.f32 %v725, %v752
        %v774 = vsub.f32 %v726, %v754
        %v775 = vsub.f32 %v727, %v756
        %v776 = vsub.f32 %v728, %v758
        %v777 = vsub.f32 %v729, %v760
        %v778 = vsub.f32 %v730, %v762
        %v779 = vmul.f32 %v715, %v618
        %v780 = vmul.f32 %v716, %v620
        %v781 = vmul.f32 %v717, %v622
        %v782 = vmul.f32 %v718, %v624
        %v783 = vmul.f32 %v719, %v626
        %v784 = vmul.f32 %v720, %v628
        %v785 = vmul.f32 %v721, %v630
        %v786 = vmul.f32 %v722, %v632
        %v787 = vmul.f32 %v715, %v508
        %v788 = vmul.f32 %v716, %v512
        %v789 = vmul.f32 %v717, %v516
        %v790 = vmul.f32 %v718, %v520
        %v791 = vmul.f32 %v719, %v524
        %v792 = vmul.f32 %v720, %v528
        %v793 = vmul.f32 %v721, %v532
        %v794 = vmul.f32 %v722, %v536
        %803 = vrot.lane.b32.xlu0 %v787, 4
        %v804 = vpop.permute.xlu0 %803
        %805 = vrot.lane.b32.xlu0 %v788, 4
        %v806 = vpop.permute.xlu0 %805
        %807 = vrot.lane.b32.xlu0 %v789, 4
        %v808 = vpop.permute.xlu0 %807
        %809 = vrot.lane.b32.xlu0 %v790, 4
        %v810 = vpop.permute.xlu0 %809
        %811 = vrot.lane.b32.xlu0 %v791, 4
        %v812 = vpop.permute.xlu0 %811
        %813 = vrot.lane.b32.xlu0 %v792, 4
        %v814 = vpop.permute.xlu0 %813
        %815 = vrot.lane.b32.xlu0 %v793, 4
        %v816 = vpop.permute.xlu0 %815
        %817 = vrot.lane.b32.xlu0 %v794, 4
        %v818 = vpop.permute.xlu0 %817
        %v827 = vadd.f32 %v779, %v804
        %v828 = vadd.f32 %v780, %v806
        %v829 = vadd.f32 %v781, %v808
        %v830 = vadd.f32 %v782, %v810
        %v831 = vadd.f32 %v783, %v812
        %v832 = vadd.f32 %v784, %v814
        %v833 = vadd.f32 %v785, %v816
        %v834 = vadd.f32 %v786, %v818
        %v835 = vsel %vm697, %v771, %v827
        %v836 = vsel %vm697, %v772, %v828
        %v837 = vsel %vm697, %v773, %v829
        %v838 = vsel %vm697, %v774, %v830
        %v839 = vsel %vm697, %v775, %v831
        %v840 = vsel %vm697, %v776, %v832
        %v841 = vsel %vm697, %v777, %v833
        %v842 = vsel %vm697, %v778, %v834
        %vm843 = vcmask 58368
        %844 = vst.msk [vmem:[%s325] sm:$0x3] %vm843, %v835
        %845 = vst.msk [vmem:[%s325 + $0x2] sm:$0x3] %vm843, %v836
        %846 = vst.msk [vmem:[%s325 + $0x4] sm:$0x3] %vm843, %v837
        %847 = vst.msk [vmem:[%s325 + $0x6] sm:$0x3] %vm843, %v838
        %848 = vst.msk [vmem:[%s325 + $0x8] sm:$0x3] %vm843, %v839
        %849 = vst.msk [vmem:[%s325 + $0xa] sm:$0x3] %vm843, %v840
        %850 = vst.msk [vmem:[%s325 + $0xc] sm:$0x3] %vm843, %v841
        %851 = vst.msk [vmem:[%s325 + $0xe] sm:$0x3] %vm843, %v842
        %s852 = sand.u32 %s156, 1
        %s853 = scalar_lea.sflag [#allocation4], %s852
        %s854 = sand.u32 %s156, 1
        %s855 = smul.addr %s854, 32
        %s856 = scalar_lea.vmem [#allocation5], %s855
        %s857 = sand.u32 %s184, 1
        %s858 = scalar_lea.sflag [#allocation7], %s857
        %s859 = sand.u32 %s184, 1
        %s860 = smul.addr %s859, 16
        %s861 = scalar_lea.vmem [#allocation6], %s860
        // Predicated region
        $region41: #{tpu_custom_call.1} parent=35 // pred_check
          %p862 = pneg %p166
        $region42: #{tpu_custom_call.1} parent=35 // pred_check_branch
          %864 = sbr.rel (%p862) target = $region44
        $region43: #{tpu_custom_call.1} parent=35 // pred_region
          %s865 = smul.u32 8, %s31
          %s867 = ssub.s32 512, 512
          %868 = vsyncadd %s853, %s867
          %s869 = smul.addr %s30, 8
          %s870 = sadd.s32 %s865, %s869
          %s871 = smul.addr %s870, 64
          %s872 = scalar_lea.hbm %s4, %s871
          %s873 = sshll.u32 %s856, 4
          %s874 = int_to_ptr.vmem [resolvable:$true] %s873
          %879 = dma.vmem_to_hbm [thread:$0]  %s874, 512, %s872, %s853, 64, 64, 4
        $region44: #{tpu_custom_call.1} parent=35 // pred_fallthru
          _
        // Predicated region
        $region45: #{tpu_custom_call.1} parent=35 // pred_check
          %p880 = pneg %p194
        $region46: #{tpu_custom_call.1} parent=35 // pred_check_branch
          %882 = sbr.rel (%p880) target = $region48
        $region47: #{tpu_custom_call.1} parent=35 // pred_region
          %s883 = smul.u32 8, %s31
          %s885 = ssub.s32 256, 256
          %886 = vsyncadd %s858, %s885
          %s887 = smul.addr %s30, 8
          %s888 = sadd.s32 %s883, %s887
          %s889 = smul.addr %s888, 32
          %s890 = scalar_lea.hbm %s5, %s889
          %s891 = sshll.u32 %s861, 4
          %s892 = int_to_ptr.vmem [resolvable:$true] %s891
          %897 = dma.vmem_to_hbm [thread:$0]  %s892, 256, %s890, %s858, 32, 32, 2
        $region48: #{tpu_custom_call.1} parent=35 // pred_fallthru
          _
      $region36: #{tpu_custom_call.1} parent=5 // pred_fallthru
        _
      %p898 = scmp.le.s32.totalorder 2, %s21
      // Predicated region
      $region49: #{tpu_custom_call.1} parent=5 // pred_check
        %p899 = pneg %p898
      $region50: #{tpu_custom_call.1} parent=5 // pred_check_branch
        %901 = sbr.rel (%p899) target = $region52
      $region51: #{tpu_custom_call.1} parent=5 // pred_region
        %s902 = ssub.s32 %s21, 2
        // Predicated region
        $region53: #{tpu_custom_call.1} parent=51 // pred_check
          %p903 = pneg %p172
        $region54: #{tpu_custom_call.1} parent=51 // pred_check_branch
          %905 = sbr.rel (%p903) target = $region56
        $region55: #{tpu_custom_call.1} parent=51 // pred_region
          %s906 = sand.u32 %s157, 1
          %s907 = scalar_lea.sflag [#allocation4], %s906
          %s908 = sand.u32 %s157, 1
          %s909 = smul.addr %s908, 32
          %s910 = scalar_lea.vmem [#allocation5], %s909
          %911 = dma.done %s907, 512
        $region56: #{tpu_custom_call.1} parent=51 // pred_fallthru
          _
        // Predicated region
        $region57: #{tpu_custom_call.1} parent=51 // pred_check
          %p912 = pneg %p200
        $region58: #{tpu_custom_call.1} parent=51 // pred_check_branch
          %914 = sbr.rel (%p912) target = $region60
        $region59: #{tpu_custom_call.1} parent=51 // pred_region
          %s915 = sand.u32 %s185, 1
          %s916 = scalar_lea.sflag [#allocation7], %s915
          %s917 = sand.u32 %s185, 1
          %s918 = smul.addr %s917, 16
          %s919 = scalar_lea.vmem [#allocation6], %s918
          %920 = dma.done %s916, 256
        $region60: #{tpu_custom_call.1} parent=51 // pred_fallthru
          _
      $region52: #{tpu_custom_call.1} parent=5 // pred_fallthru
        _
    $region6: #{tpu_custom_call.1} parent=1 // loop_footer
      %s25 = sadd.s32 1, %s21
    $region7: #{tpu_custom_call.1} parent=1 // loop_footer_branch
      %20 = sbr.rel target = $region3
    $region8: #{tpu_custom_call.1} parent=1 // loop_exit
      _
    %921 = vsyncpa [#allocation3], 1
    %s922 = scalar_lea.sflag [#allocation3], 1
    %923 = vsyncpa %s922, 1
    %924 = vsyncpa [#allocation4], 1
    %s925 = scalar_lea.sflag [#allocation4], 1
    %926 = vsyncpa %s925, 1
    %927 = vsyncpa [#allocation7], 1
    %s928 = scalar_lea.sflag [#allocation7], 1
    %929 = vsyncpa %s928, 1

</llo_original>
